<compile_context>
chip_gen: v6e
topology: v6e:2x2x1
jax: 0.10.0
libtpu: 0.0.40
codegen_flags: <defaults>
</compile_context>

<pallas_src>
import functools

import jax
import jax.numpy as jnp
from jax.experimental import pallas as pl
from jax.experimental.pallas import tpu as pltpu


def _cdiv(a, b):
    return (a + b - 1) // b


def _round_up(n, m):
    return _cdiv(n, m) * m


# --------------------------------------------------------------------------- #
# Kernels
# --------------------------------------------------------------------------- #
def _epilogue(h1_pre, b12_ref, w2_ref, w3l_ref, out_ref):
    """h1_pre: (TB, 64) f32 layer-1 pre-bias output -> writes (1, 8, TB)."""
    b12 = b12_ref[...]                                    # (2, 64) f32
    h1 = jnp.maximum(h1_pre + b12[0:1, :], 0.0)           # (TB, 64) f32
    h2 = jnp.dot(h1.astype(jnp.bfloat16), w2_ref[...],
                 preferred_element_type=jnp.float32)
    h2 = jnp.maximum(h2 + b12[1:2, :], 0.0)               # (TB, 64) f32
    # Layer 3 computed transposed (contract on the feature axis) so the stored
    # tile is lane-dense (8, TB); only row 0 of w3l is real, rows 1..7 are 0.
    v = jax.lax.dot_general(
        w3l_ref[...], h2.astype(jnp.bfloat16),
        dimension_numbers=(((1,), (1,)), ((), ())),
        preferred_element_type=jnp.float32)               # (8, TB)
    out_ref[...] = v[None]                                # (1, 8, TB)


def _value_net_kernel_resident(x_ref, w1_ref, b12_ref, w2_ref, w3l_ref,
                               out_ref):
    """Fast path: grid = (batch tiles,), whole w1 resident, no scratch/when."""
    h1_pre = jnp.dot(x_ref[...].astype(jnp.bfloat16), w1_ref[...],
                     preferred_element_type=jnp.float32)
    _epilogue(h1_pre, b12_ref, w2_ref, w3l_ref, out_ref)


def _value_net_kernel_ktiled(x_ref, w1_ref, b12_ref, w2_ref, w3l_ref, out_ref,
                             acc_ref, *, feat_dim, k_block, ragged):
    """Fallback for very large F: grid = (batch tiles, K tiles); K is last."""
    k = pl.program_id(1)

    @pl.when(k == 0)
    def _():
        acc_ref[...] = jnp.zeros_like(acc_ref)

    x = x_ref[...]                                        # (TB, TK) native dtype
    w1 = w1_ref[...]                                      # (TK, 64) bf16
    if ragged:
        # Mask the out-of-range tail of the last K tile.  Both operands must
        # be masked: out-of-bounds block reads are unspecified and 0*NaN would
        # poison the accumulator.  VPU cost is hidden under the HBM bound.
        col = k * k_block + jax.lax.broadcasted_iota(jnp.int32, (1, k_block), 1)
        x = jnp.where(col < feat_dim, x, 0.0)
        row = k * k_block + jax.lax.broadcasted_iota(jnp.int32, (k_block, 1), 0)
        w1 = jnp.where(row < feat_dim, w1, 0.0)

    acc_ref[...] += jnp.dot(x.astype(jnp.bfloat16), w1,
                            preferred_element_type=jnp.float32)

    @pl.when(k == pl.num_programs(1) - 1)
    def _():
        _epilogue(acc_ref[...], b12_ref, w2_ref, w3l_ref, out_ref)


# --------------------------------------------------------------------------- #
# Parameter packing (one-time, hoisted out of the forward pass)
# --------------------------------------------------------------------------- #
def pack_params(params):
    """Pack ValueNet weights for the kernel once; reuse across forward calls."""
    w1, b1, w2, b2, w3, b3 = params
    H = w1.shape[1]
    w3_lane = jnp.zeros((8, H), jnp.bfloat16).at[0].set(
        w3[:, 0].astype(jnp.bfloat16))                    # row 0 real, rest 0
    return dict(
        w1=w1.astype(jnp.bfloat16),                       # (F, 64)
        b12=jnp.concatenate([b1.reshape(1, H), b2.reshape(1, H)],
                            axis=0).astype(jnp.float32),  # (2, 64)
        w2=w2.astype(jnp.bfloat16),                       # (64, 64)
        w3_lane=w3_lane,                                  # (8, 64)
        b3=jnp.asarray(b3, jnp.float32).reshape(1, 1),    # folded in wrapper
    )


# --------------------------------------------------------------------------- #
# Tiling policy
# --------------------------------------------------------------------------- #
def _choose_batch_tile(B, step_bytes_per_row, block_b, vmem_free_bytes,
                       extra_bytes_per_row=0):
    per_row = 2 * step_bytes_per_row + extra_bytes_per_row + 1536
    vmem_cap = max(8, (max(vmem_free_bytes, 8 * per_row) // per_row) // 8 * 8)
    # >= ~1 MiB of x per grid step (per-step overhead ~0.35 us), but prefer a
    # 2-way batch split so both v7x TensorCores get work when B is mid-sized.
    floor_rows = _round_up(_cdiv(1 << 20, step_bytes_per_row), 8)
    split_rows = _round_up(_cdiv(B, 2), 8)
    tb = max(floor_rows, min(split_rows, block_b))
    tb = min(tb, block_b, _round_up(B, 8), vmem_cap)
    return max(tb, 8)


# --------------------------------------------------------------------------- #
# Forward
# --------------------------------------------------------------------------- #
def value_net_forward(x, packed, *, block_b=1024, block_k=4096,
                      k_tile_threshold=32768, vmem_budget_bytes=20 << 20):
    """x: (B, *obs_shape) float32 or bfloat16.  Returns (B, 1) float32."""
    w1, b12, w2, w3l, b3 = (packed["w1"], packed["b12"], packed["w2"],
                            packed["w3_lane"], packed["b3"])
    B = x.shape[0]
    x2 = x.reshape(B, -1)                 # same ordering as torch flatten(1)
    F = x2.shape[1]
    H = w1.shape[1]                       # 64
    assert w1.shape[0] == F, (w1.shape, F)
    x_bytes = x2.dtype.itemsize
    misc_bytes = 2 * (H * H * 2 + 8 * H * 2 + 2 * H * 4) + (1 << 16)

    resident_w1_bytes = 2 * F * H * 2     # double-buffered bf16 w1
    use_resident = (F <= k_tile_threshold and
                    resident_w1_bytes + 2 * 8 * F * x_bytes + misc_bytes
                    <= vmem_budget_bytes)

    if use_resident:
        tb = _choose_batch_tile(
            B, F * x_bytes, block_b,
            vmem_budget_bytes - resident_w1_bytes - misc_bytes)
        if tb >= B:                       # full-dim block: no OOB rows at all
            tb = B
        nb = _cdiv(B, tb)
        grid = (nb,)
        kernel = _value_net_kernel_resident
        in_specs = [
            pl.BlockSpec((tb, F), lambda i: (i, 0)),       # x: streamed
            pl.BlockSpec((F, H), lambda i: (0, 0)),        # w1: resident
            pl.BlockSpec((2, H), lambda i: (0, 0)),        # b1|b2: resident
            pl.BlockSpec((H, H), lambda i: (0, 0)),        # w2: resident
            pl.BlockSpec((8, H), lambda i: (0, 0)),        # w3^T pad: resident
        ]
        out_spec = pl.BlockSpec((1, 8, tb), lambda i: (i, 0, 0))
        scratch_shapes = []
        dim_sem = ("parallel",)
        w1_reads = 1
    else:
        tk = min(_round_up(block_k, 128), _round_up(F, 128))
        nk = _cdiv(F, tk)
        ragged = (F % tk) != 0
        tb = _choose_batch_tile(
            B, tk * x_bytes, block_b,
            vmem_budget_bytes - 2 * tk * H * 2 - misc_bytes,
            extra_bytes_per_row=H * 4)                     # f32 accumulator
        if tb >= B:
            tb = B
        nb = _cdiv(B, tb)
        grid = (nb, nk)
        kernel = functools.partial(_value_net_kernel_ktiled,
                                   feat_dim=F, k_block=tk, ragged=ragged)
        in_specs = [
            pl.BlockSpec((tb, tk), lambda i, k: (i, k)),   # x: streamed
            pl.BlockSpec((tk, H), lambda i, k: (k, 0)),    # w1: K-tiled
            pl.BlockSpec((2, H), lambda i, k: (0, 0)),
            pl.BlockSpec((H, H), lambda i, k: (0, 0)),
            pl.BlockSpec((8, H), lambda i, k: (0, 0)),
        ]
        out_spec = pl.BlockSpec((1, 8, tb), lambda i, k: (i, 0, 0))
        scratch_shapes = [pltpu.VMEM((tb, H), jnp.float32)]
        dim_sem = ("parallel", "arbitrary")
        w1_reads = nb

    cost = pl.CostEstimate(
        flops=int(2 * nb * tb * (F * H + H * H + H * 8)),
        transcendentals=0,
        bytes_accessed=int(B * F * x_bytes + w1_reads * F * H * 2
                           + H * H * 2 + 8 * H * 2 + 2 * H * 4
                           + nb * 8 * tb * 4))

    out = pl.pallas_call(
        kernel,
        out_shape=jax.ShapeDtypeStruct((nb, 8, tb), jnp.float32),
        grid=grid,
        in_specs=in_specs,
        out_specs=out_spec,
        scratch_shapes=scratch_shapes,
        compiler_params=pltpu.CompilerParams(
            dimension_semantics=dim_sem,
            vmem_limit_bytes=32 * 1024 * 1024),
        cost_estimate=cost,
    )(x2, w1, b12, w2, w3l)

    # Row 0 of the lane-dense slab holds the values; fold the scalar bias here.
    v = out[:, 0, :].reshape(nb * tb)[:B].reshape(B, 1)
    return v + b3


# --------------------------------------------------------------------------- #
# Test-time parameter init & pure-JAX reference
# --------------------------------------------------------------------------- #
def make_params(key, flat_obs_dim, hidden=64):
    """Deterministic orthogonal-ish init; non-zero biases exercise the bias path."""
    ks = jax.random.split(key, 6)

    def ortho(k, n_in, n_out, gain=1.0):
        a = jax.random.normal(k, (max(n_in, n_out), min(n_in, n_out)),
                              dtype=jnp.float32)
        q, _ = jnp.linalg.qr(a)
        q = q[:, :min(n_in, n_out)]
        w = q if n_in >= n_out else q.T
        return gain * w[:n_in, :n_out]

    w1 = ortho(ks[0], flat_obs_dim, hidden)
    b1 = 0.5 * jax.random.normal(ks[3], (1, hidden), dtype=jnp.float32)
    w2 = ortho(ks[1], hidden, hidden)
    b2 = 0.5 * jax.random.normal(ks[4], (1, hidden), dtype=jnp.float32)
    w3 = ortho(ks[2], hidden, 1)
    b3 = 0.5 * jax.random.normal(ks[5], (1, 1), dtype=jnp.float32)
    return (w1, b1, w2, b2, w3, b3)


def value_net_ref(x, params):
    """Pure-JAX f32 reference for correctness checking."""
    w1, b1, w2, b2, w3, b3 = params
    h = x.reshape(x.shape[0], -1)
    h = jnp.maximum(h @ w1 + b1, 0.0)
    h = jnp.maximum(h @ w2 + b2, 0.0)
    return h @ w3 + b3


if __name__ == "__main__":
    key = jax.random.PRNGKey(0)
    k_x, k_p, k_x2, k_p2 = jax.random.split(key, 4)

    # --- Test 1: small batch, obs (4,16,16) -> F=1024 (resident-w1 path). ---
    B, obs_shape = 4, (4, 16, 16)
    flat_obs_dim = 1
    for d in obs_shape:
        flat_obs_dim *= d

    x = jax.random.normal(k_x, (B,) + obs_shape, dtype=jnp.float32)
    params = make_params(k_p, flat_obs_dim)
    packed = pack_params(params)

    fwd = jax.jit(value_net_forward)
    out = jax.block_until_ready(fwd(x, packed))
    assert out.shape == (B, 1), out.shape
    ref = value_net_ref(x, params)
    # Loose tolerance: weights / layer-1 inputs go through bf16 (f32 accum).
    assert jnp.allclose(out, ref, atol=5e-2, rtol=5e-2), (
        f"resident path max abs err {jnp.max(jnp.abs(out - ref))}")

    # --- Test 2: force the K-tiled fallback with a ragged feature dim. ------
    B2, F2 = 16, 600                      # 600 % 256 != 0 -> masked last tile
    x2 = jax.random.normal(k_x2, (B2, F2), dtype=jnp.float32)
    params2 = make_params(k_p2, F2)
    packed2 = pack_params(params2)
    out2 = jax.block_until_ready(
        value_net_forward(x2, packed2, block_k=256, k_tile_threshold=0))
    assert out2.shape == (B2, 1), out2.shape
    ref2 = value_net_ref(x2, params2)
    assert jnp.allclose(out2, ref2, atol=5e-2, rtol=5e-2), (
        f"k-tiled path max abs err {jnp.max(jnp.abs(out2 - ref2))}")

    print("KERNEL_OK")
</pallas_src>

<mosaic_0001>
module attributes {stable_mosaic.version = 11 : i64} {
  func.func @_value_net_kernel_resident(%arg0: i32, %arg1: memref<4x1024xf32, #tpu.memory_space<vmem>>, %arg2: memref<1024x64xbf16, #tpu.memory_space<vmem>>, %arg3: memref<2x64xf32, #tpu.memory_space<vmem>>, %arg4: memref<64x64xbf16, #tpu.memory_space<vmem>>, %arg5: memref<8x64xbf16, #tpu.memory_space<vmem>>, %arg6: memref<1x8x4xf32, #tpu.memory_space<vmem>>) attributes {dimension_semantics = [#tpu.dimension_semantics<parallel>], iteration_bounds = array<i64: 1>, scalar_prefetch = 0 : i64, scratch_operands = 0 : i64, tpu.core_type = #tpu.core_type<tc>, window_params = [{transform_indices = @transform_0, window_bounds = array<i64: 4, 1024>}, {pipeline_mode = #tpu.pipeline_mode<synchronous>, transform_indices = @transform_1, window_bounds = array<i64: 1024, 64>}, {pipeline_mode = #tpu.pipeline_mode<synchronous>, transform_indices = @transform_2, window_bounds = array<i64: 2, 64>}, {pipeline_mode = #tpu.pipeline_mode<synchronous>, transform_indices = @transform_3, window_bounds = array<i64: 64, 64>}, {pipeline_mode = #tpu.pipeline_mode<synchronous>, transform_indices = @transform_4, window_bounds = array<i64: 8, 64>}, {transform_indices = @transform_5, window_bounds = array<i64: 1, 8, 4>}]} {
    %c0 = arith.constant 0 : index
    %c0_0 = arith.constant 0 : index
    %0 = vector.load %arg1[%c0, %c0_0] : memref<4x1024xf32, #tpu.memory_space<vmem>>, vector<4x1024xf32>
    %1 = arith.truncf %0 : vector<4x1024xf32> to vector<4x1024xbf16>
    %c0_1 = arith.constant 0 : index
    %c0_2 = arith.constant 0 : index
    %2 = vector.load %arg2[%c0_1, %c0_2] : memref<1024x64xbf16, #tpu.memory_space<vmem>>, vector<1024x64xbf16>
    %cst = arith.constant dense<0.000000e+00> : vector<4x64xf32>
    %3 = tpu.matmul %1, %2, %cst {dimension_numbers = #tpu.dot_dimension_numbers<[1], [0], [0], [1], [0, 0, 1, 1], [], []>} : vector<4x1024xbf16>, vector<1024x64xbf16>, vector<4x64xf32> -> vector<4x64xf32>
    %c0_3 = arith.constant 0 : index
    %c0_4 = arith.constant 0 : index
    %4 = vector.load %arg3[%c0_3, %c0_4] : memref<2x64xf32, #tpu.memory_space<vmem>>, vector<2x64xf32>
    %5 = vector.extract_strided_slice %4 {offsets = [0, 0], sizes = [1, 64], strides = [1, 1]} : vector<2x64xf32> to vector<1x64xf32>
    %6 = vector.broadcast %5 : vector<1x64xf32> to vector<4x64xf32>
    %7 = arith.addf %3, %6 : vector<4x64xf32>
    %cst_5 = arith.constant 0.000000e+00 : f32
    %8 = vector.broadcast %cst_5 : f32 to vector<4x64xf32>
    %9 = arith.maximumf %7, %8 : vector<4x64xf32>
    %10 = arith.truncf %9 : vector<4x64xf32> to vector<4x64xbf16>
    %c0_6 = arith.constant 0 : index
    %c0_7 = arith.constant 0 : index
    %11 = vector.load %arg4[%c0_6, %c0_7] : memref<64x64xbf16, #tpu.memory_space<vmem>>, vector<64x64xbf16>
    %cst_8 = arith.constant dense<0.000000e+00> : vector<4x64xf32>
    %12 = tpu.matmul %10, %11, %cst_8 {dimension_numbers = #tpu.dot_dimension_numbers<[1], [0], [0], [1], [0, 0, 1, 1], [], []>} : vector<4x64xbf16>, vector<64x64xbf16>, vector<4x64xf32> -> vector<4x64xf32>
    %13 = vector.extract_strided_slice %4 {offsets = [1, 0], sizes = [1, 64], strides = [1, 1]} : vector<2x64xf32> to vector<1x64xf32>
    %14 = vector.broadcast %13 : vector<1x64xf32> to vector<4x64xf32>
    %15 = arith.addf %12, %14 : vector<4x64xf32>
    %cst_9 = arith.constant 0.000000e+00 : f32
    %16 = vector.broadcast %cst_9 : f32 to vector<4x64xf32>
    %17 = arith.maximumf %15, %16 : vector<4x64xf32>
    %c0_10 = arith.constant 0 : index
    %c0_11 = arith.constant 0 : index
    %18 = vector.load %arg5[%c0_10, %c0_11] : memref<8x64xbf16, #tpu.memory_space<vmem>>, vector<8x64xbf16>
    %19 = arith.truncf %17 : vector<4x64xf32> to vector<4x64xbf16>
    %cst_12 = arith.constant dense<0.000000e+00> : vector<8x4xf32>
    %20 = tpu.matmul %18, %19, %cst_12 {dimension_numbers = #tpu.dot_dimension_numbers<[1], [1], [0], [0], [0, 0, 1, 0], [], []>} : vector<8x64xbf16>, vector<4x64xbf16>, vector<8x4xf32> -> vector<8x4xf32>
    %21 = vector.shape_cast %20 : vector<8x4xf32> to vector<1x8x4xf32>
    %c0_13 = arith.constant 0 : index
    %c0_14 = arith.constant 0 : index
    %c0_15 = arith.constant 0 : index
    %22 = vector.load %arg6[%c0_13, %c0_14, %c0_15] : memref<1x8x4xf32, #tpu.memory_space<vmem>>, vector<1x8x4xf32>
    tpu.vector_store %arg6[%c0_13, %c0_14, %c0_15], %21 {strides = array<i32>} : memref<1x8x4xf32, #tpu.memory_space<vmem>>, vector<1x8x4xf32>,
    return
  }
  func.func @transform_0(%arg0: i32) -> (i32, i32) {
    %c0_i32 = arith.constant 0 : i32
    %c0_i32_0 = arith.constant 0 : i32
    return %arg0, %c0_i32 : i32, i32
  }
  func.func @transform_1(%arg0: i32) -> (i32, i32) {
    %c0_i32 = arith.constant 0 : i32
    %c0_i32_0 = arith.constant 0 : i32
    %c0_i32_1 = arith.constant 0 : i32
    return %c0_i32, %c0_i32_0 : i32, i32
  }
  func.func @transform_2(%arg0: i32) -> (i32, i32) {
    %c0_i32 = arith.constant 0 : i32
    %c0_i32_0 = arith.constant 0 : i32
    %c0_i32_1 = arith.constant 0 : i32
    return %c0_i32, %c0_i32_0 : i32, i32
  }
  func.func @transform_3(%arg0: i32) -> (i32, i32) {
    %c0_i32 = arith.constant 0 : i32
    %c0_i32_0 = arith.constant 0 : i32
    %c0_i32_1 = arith.constant 0 : i32
    return %c0_i32, %c0_i32_0 : i32, i32
  }
  func.func @transform_4(%arg0: i32) -> (i32, i32) {
    %c0_i32 = arith.constant 0 : i32
    %c0_i32_0 = arith.constant 0 : i32
    %c0_i32_1 = arith.constant 0 : i32
    return %c0_i32, %c0_i32_0 : i32, i32
  }
  func.func @transform_5(%arg0: i32) -> (i32, i32, i32) {
    %c0_i32 = arith.constant 0 : i32
    %c0_i32_0 = arith.constant 0 : i32
    %c0_i32_1 = arith.constant 0 : i32
    return %arg0, %c0_i32, %c0_i32_0 : i32, i32, i32
  }
}

</mosaic_0001>

<llo_original>
// kernel: value_net_forward.1
$region0: #{value_net_forward.1}
  #allocation0 [shape = 'u32[]', space=smem, size = 0x4, offset = 0x4, fixed_abs, tag = 'smem constant byte address 0x4 - core index']
  #allocation1 [shape = 'u32[144,128]{1,0:T(1,128)}', space=vmem, size = 0x12000, scoped, tag = 'internal scratch']
  %s0 = inlined_call_operand.vmem [shape: f32[4,1024], index: 0, kind: input, shape index: {}]
  %s1 = inlined_call_operand.vmem [shape: bf16[1024,64], index: 1, kind: input, shape index: {}]
  %s2 = inlined_call_operand.vmem [shape: f32[2,64], index: 2, kind: input, shape index: {}]
  %s3 = inlined_call_operand.vmem [shape: bf16[64,64], index: 3, kind: input, shape index: {}]
  %s4 = inlined_call_operand.vmem [shape: bf16[8,64], index: 4, kind: input, shape index: {}]
  %s5 = inlined_call_operand.vmem [shape: f32[1,8,4], index: 5, kind: output, shape index: {}]
  %s6 = sld [smem:[#allocation0]]
  $region30: #{value_net_forward.1} parent=0
    _
  %s8 = ssub.s32 1, %s6
  %s9 = scalar_select 0, %s8, %s6
  // Predicated region
  $region2: #{value_net_forward.1} parent=0 // pred_check
    _
  $region3: #{value_net_forward.1} parent=0 // pred_check_branch
    %11 = sbr.rel (0) target = $region5
  $region4: #{value_net_forward.1} parent=0 // pred_region
    _
  $region5: #{value_net_forward.1} parent=0 // pred_fallthru
    _
  // Predicated region
  $region6: #{value_net_forward.1} parent=0 // pred_check
    _
  $region7: #{value_net_forward.1} parent=0 // pred_check_branch
    %13 = sbr.rel (0) target = $region9
  $region8: #{value_net_forward.1} parent=0 // pred_region
    _
  $region9: #{value_net_forward.1} parent=0 // pred_fallthru
    _
  // Predicated region
  $region10: #{value_net_forward.1} parent=0 // pred_check
    _
  $region11: #{value_net_forward.1} parent=0 // pred_check_branch
    %15 = sbr.rel (0) target = $region13
  $region12: #{value_net_forward.1} parent=0 // pred_region
    _
  $region13: #{value_net_forward.1} parent=0 // pred_fallthru
    _
  // Predicated region
  $region14: #{value_net_forward.1} parent=0 // pred_check
    _
  $region15: #{value_net_forward.1} parent=0 // pred_check_branch
    %17 = sbr.rel (0) target = $region17
  $region16: #{value_net_forward.1} parent=0 // pred_region
    _
  $region17: #{value_net_forward.1} parent=0 // pred_fallthru
    _
  // Predicated region
  $region18: #{value_net_forward.1} parent=0 // pred_check
    _
  $region19: #{value_net_forward.1} parent=0 // pred_check_branch
    %19 = sbr.rel (0) target = $region21
  $region20: #{value_net_forward.1} parent=0 // pred_region
    _
  $region21: #{value_net_forward.1} parent=0 // pred_fallthru
    _
  %v21 = vld [vmem:[%s0] sm:$0xff]
  %v22 = vld [vmem:[%s0 + $0x8] sm:$0xff]
  %v23 = vld [vmem:[%s0 + $0x10] sm:$0xff]
  %v24 = vld [vmem:[%s0 + $0x18] sm:$0xff]
  %v29 = vcombine.high %v21, %v21
  %v30 = vcombine.high %v22, %v22
  %v31 = vcombine.high %v23, %v23
  %v32 = vcombine.high %v24, %v24
  %v37 = vpack.c.bf16 %v21, %v21
  %v38 = vpack.c.bf16 %v29, %v29
  %v39 = vpack.c.bf16 %v22, %v22
  %v40 = vpack.c.bf16 %v30, %v30
  %v41 = vpack.c.bf16 %v23, %v23
  %v42 = vpack.c.bf16 %v31, %v31
  %v43 = vpack.c.bf16 %v24, %v24
  %v44 = vpack.c.bf16 %v32, %v32
  %v45 = vld [vmem:[%s1] sm:$0xf]
  %v46 = vld [vmem:[%s1 + $0x4] sm:$0xf]
  %v47 = vld [vmem:[%s1 + $0x8] sm:$0xf]
  %v48 = vld [vmem:[%s1 + $0xc] sm:$0xf]
  %v49 = vld [vmem:[%s1 + $0x10] sm:$0xf]
  %v50 = vld [vmem:[%s1 + $0x14] sm:$0xf]
  %v51 = vld [vmem:[%s1 + $0x18] sm:$0xf]
  %v52 = vld [vmem:[%s1 + $0x1c] sm:$0xf]
  %v53 = vld [vmem:[%s1 + $0x20] sm:$0xf]
  %v54 = vld [vmem:[%s1 + $0x24] sm:$0xf]
  %v55 = vld [vmem:[%s1 + $0x28] sm:$0xf]
  %v56 = vld [vmem:[%s1 + $0x2c] sm:$0xf]
  %v57 = vld [vmem:[%s1 + $0x30] sm:$0xf]
  %v58 = vld [vmem:[%s1 + $0x34] sm:$0xf]
  %v59 = vld [vmem:[%s1 + $0x38] sm:$0xf]
  %v60 = vld [vmem:[%s1 + $0x3c] sm:$0xf]
  %v61 = vld [vmem:[%s1 + $0x40] sm:$0xf]
  %v62 = vld [vmem:[%s1 + $0x44] sm:$0xf]
  %v63 = vld [vmem:[%s1 + $0x48] sm:$0xf]
  %v64 = vld [vmem:[%s1 + $0x4c] sm:$0xf]
  %v65 = vld [vmem:[%s1 + $0x50] sm:$0xf]
  %v66 = vld [vmem:[%s1 + $0x54] sm:$0xf]
  %v67 = vld [vmem:[%s1 + $0x58] sm:$0xf]
  %v68 = vld [vmem:[%s1 + $0x5c] sm:$0xf]
  %v69 = vld [vmem:[%s1 + $0x60] sm:$0xf]
  %v70 = vld [vmem:[%s1 + $0x64] sm:$0xf]
  %v71 = vld [vmem:[%s1 + $0x68] sm:$0xf]
  %v72 = vld [vmem:[%s1 + $0x6c] sm:$0xf]
  %v73 = vld [vmem:[%s1 + $0x70] sm:$0xf]
  %v74 = vld [vmem:[%s1 + $0x74] sm:$0xf]
  %v75 = vld [vmem:[%s1 + $0x78] sm:$0xf]
  %v76 = vld [vmem:[%s1 + $0x7c] sm:$0xf]
  %v77 = vld [vmem:[%s1 + $0x80] sm:$0xf]
  %v78 = vld [vmem:[%s1 + $0x84] sm:$0xf]
  %v79 = vld [vmem:[%s1 + $0x88] sm:$0xf]
  %v80 = vld [vmem:[%s1 + $0x8c] sm:$0xf]
  %v81 = vld [vmem:[%s1 + $0x90] sm:$0xf]
  %v82 = vld [vmem:[%s1 + $0x94] sm:$0xf]
  %v83 = vld [vmem:[%s1 + $0x98] sm:$0xf]
  %v84 = vld [vmem:[%s1 + $0x9c] sm:$0xf]
  %v85 = vld [vmem:[%s1 + $0xa0] sm:$0xf]
  %v86 = vld [vmem:[%s1 + $0xa4] sm:$0xf]
  %v87 = vld [vmem:[%s1 + $0xa8] sm:$0xf]
  %v88 = vld [vmem:[%s1 + $0xac] sm:$0xf]
  %v89 = vld [vmem:[%s1 + $0xb0] sm:$0xf]
  %v90 = vld [vmem:[%s1 + $0xb4] sm:$0xf]
  %v91 = vld [vmem:[%s1 + $0xb8] sm:$0xf]
  %v92 = vld [vmem:[%s1 + $0xbc] sm:$0xf]
  %v93 = vld [vmem:[%s1 + $0xc0] sm:$0xf]
  %v94 = vld [vmem:[%s1 + $0xc4] sm:$0xf]
  %v95 = vld [vmem:[%s1 + $0xc8] sm:$0xf]
  %v96 = vld [vmem:[%s1 + $0xcc] sm:$0xf]
  %v97 = vld [vmem:[%s1 + $0xd0] sm:$0xf]
  %v98 = vld [vmem:[%s1 + $0xd4] sm:$0xf]
  %v99 = vld [vmem:[%s1 + $0xd8] sm:$0xf]
  %v100 = vld [vmem:[%s1 + $0xdc] sm:$0xf]
  %v101 = vld [vmem:[%s1 + $0xe0] sm:$0xf]
  %v102 = vld [vmem:[%s1 + $0xe4] sm:$0xf]
  %v103 = vld [vmem:[%s1 + $0xe8] sm:$0xf]
  %v104 = vld [vmem:[%s1 + $0xec] sm:$0xf]
  %v105 = vld [vmem:[%s1 + $0xf0] sm:$0xf]
  %v106 = vld [vmem:[%s1 + $0xf4] sm:$0xf]
  %v107 = vld [vmem:[%s1 + $0xf8] sm:$0xf]
  %v108 = vld [vmem:[%s1 + $0xfc] sm:$0xf]
  %v109 = vld [vmem:[%s1 + $0x100] sm:$0xf]
  %v110 = vld [vmem:[%s1 + $0x104] sm:$0xf]
  %v111 = vld [vmem:[%s1 + $0x108] sm:$0xf]
  %v112 = vld [vmem:[%s1 + $0x10c] sm:$0xf]
  %v113 = vld [vmem:[%s1 + $0x110] sm:$0xf]
  %v114 = vld [vmem:[%s1 + $0x114] sm:$0xf]
  %v115 = vld [vmem:[%s1 + $0x118] sm:$0xf]
  %v116 = vld [vmem:[%s1 + $0x11c] sm:$0xf]
  %v117 = vld [vmem:[%s1 + $0x120] sm:$0xf]
  %v118 = vld [vmem:[%s1 + $0x124] sm:$0xf]
  %v119 = vld [vmem:[%s1 + $0x128] sm:$0xf]
  %v120 = vld [vmem:[%s1 + $0x12c] sm:$0xf]
  %v121 = vld [vmem:[%s1 + $0x130] sm:$0xf]
  %v122 = vld [vmem:[%s1 + $0x134] sm:$0xf]
  %v123 = vld [vmem:[%s1 + $0x138] sm:$0xf]
  %v124 = vld [vmem:[%s1 + $0x13c] sm:$0xf]
  %v125 = vld [vmem:[%s1 + $0x140] sm:$0xf]
  %v126 = vld [vmem:[%s1 + $0x144] sm:$0xf]
  %v127 = vld [vmem:[%s1 + $0x148] sm:$0xf]
  %v128 = vld [vmem:[%s1 + $0x14c] sm:$0xf]
  %v129 = vld [vmem:[%s1 + $0x150] sm:$0xf]
  %v130 = vld [vmem:[%s1 + $0x154] sm:$0xf]
  %v131 = vld [vmem:[%s1 + $0x158] sm:$0xf]
  %v132 = vld [vmem:[%s1 + $0x15c] sm:$0xf]
  %v133 = vld [vmem:[%s1 + $0x160] sm:$0xf]
  %v134 = vld [vmem:[%s1 + $0x164] sm:$0xf]
  %v135 = vld [vmem:[%s1 + $0x168] sm:$0xf]
  %v136 = vld [vmem:[%s1 + $0x16c] sm:$0xf]
  %v137 = vld [vmem:[%s1 + $0x170] sm:$0xf]
  %v138 = vld [vmem:[%s1 + $0x174] sm:$0xf]
  %v139 = vld [vmem:[%s1 + $0x178] sm:$0xf]
  %v140 = vld [vmem:[%s1 + $0x17c] sm:$0xf]
  %v141 = vld [vmem:[%s1 + $0x180] sm:$0xf]
  %v142 = vld [vmem:[%s1 + $0x184] sm:$0xf]
  %v143 = vld [vmem:[%s1 + $0x188] sm:$0xf]
  %v144 = vld [vmem:[%s1 + $0x18c] sm:$0xf]
  %v145 = vld [vmem:[%s1 + $0x190] sm:$0xf]
  %v146 = vld [vmem:[%s1 + $0x194] sm:$0xf]
  %v147 = vld [vmem:[%s1 + $0x198] sm:$0xf]
  %v148 = vld [vmem:[%s1 + $0x19c] sm:$0xf]
  %v149 = vld [vmem:[%s1 + $0x1a0] sm:$0xf]
  %v150 = vld [vmem:[%s1 + $0x1a4] sm:$0xf]
  %v151 = vld [vmem:[%s1 + $0x1a8] sm:$0xf]
  %v152 = vld [vmem:[%s1 + $0x1ac] sm:$0xf]
  %v153 = vld [vmem:[%s1 + $0x1b0] sm:$0xf]
  %v154 = vld [vmem:[%s1 + $0x1b4] sm:$0xf]
  %v155 = vld [vmem:[%s1 + $0x1b8] sm:$0xf]
  %v156 = vld [vmem:[%s1 + $0x1bc] sm:$0xf]
  %v157 = vld [vmem:[%s1 + $0x1c0] sm:$0xf]
  %v158 = vld [vmem:[%s1 + $0x1c4] sm:$0xf]
  %v159 = vld [vmem:[%s1 + $0x1c8] sm:$0xf]
  %v160 = vld [vmem:[%s1 + $0x1cc] sm:$0xf]
  %v161 = vld [vmem:[%s1 + $0x1d0] sm:$0xf]
  %v162 = vld [vmem:[%s1 + $0x1d4] sm:$0xf]
  %v163 = vld [vmem:[%s1 + $0x1d8] sm:$0xf]
  %v164 = vld [vmem:[%s1 + $0x1dc] sm:$0xf]
  %v165 = vld [vmem:[%s1 + $0x1e0] sm:$0xf]
  %v166 = vld [vmem:[%s1 + $0x1e4] sm:$0xf]
  %v167 = vld [vmem:[%s1 + $0x1e8] sm:$0xf]
  %v168 = vld [vmem:[%s1 + $0x1ec] sm:$0xf]
  %v169 = vld [vmem:[%s1 + $0x1f0] sm:$0xf]
  %v170 = vld [vmem:[%s1 + $0x1f4] sm:$0xf]
  %v171 = vld [vmem:[%s1 + $0x1f8] sm:$0xf]
  %v172 = vld [vmem:[%s1 + $0x1fc] sm:$0xf]
  %v173 = vld [vmem:[%s2] sm:$0x3]
  %v174 = vlaneseq
  %v175 = vshrl.u32 %v174, 7
  %v176 = vsub.s32 0, %v175
  %v177 = vrot.slane %v173, %v176
  %v306 = vunpack.c.l.b16 %v45
  %v307 = vunpack.c.l.b16 %v46
  %v308 = vunpack.c.l.b16 %v47
  %v309 = vunpack.c.l.b16 %v48
  %v310 = vunpack.c.l.b16 %v49
  %v311 = vunpack.c.l.b16 %v50
  %v312 = vunpack.c.l.b16 %v51
  %v313 = vunpack.c.l.b16 %v52
  %v314 = vunpack.c.l.b16 %v53
  %v315 = vunpack.c.l.b16 %v54
  %v316 = vunpack.c.l.b16 %v55
  %v317 = vunpack.c.l.b16 %v56
  %v318 = vunpack.c.l.b16 %v57
  %v319 = vunpack.c.l.b16 %v58
  %v320 = vunpack.c.l.b16 %v59
  %v321 = vunpack.c.l.b16 %v60
  %v322 = vunpack.c.l.b16 %v61
  %v323 = vunpack.c.l.b16 %v62
  %v324 = vunpack.c.l.b16 %v63
  %v325 = vunpack.c.l.b16 %v64
  %v326 = vunpack.c.l.b16 %v65
  %v327 = vunpack.c.l.b16 %v66
  %v328 = vunpack.c.l.b16 %v67
  %v329 = vunpack.c.l.b16 %v68
  %v330 = vunpack.c.l.b16 %v69
  %v331 = vunpack.c.l.b16 %v70
  %v332 = vunpack.c.l.b16 %v71
  %v333 = vunpack.c.l.b16 %v72
  %v334 = vunpack.c.l.b16 %v73
  %v335 = vunpack.c.l.b16 %v74
  %v336 = vunpack.c.l.b16 %v75
  %v337 = vunpack.c.l.b16 %v76
  %v338 = vunpack.c.l.b16 %v77
  %v339 = vunpack.c.l.b16 %v78
  %v340 = vunpack.c.l.b16 %v79
  %v341 = vunpack.c.l.b16 %v80
  %v342 = vunpack.c.l.b16 %v81
  %v343 = vunpack.c.l.b16 %v82
  %v344 = vunpack.c.l.b16 %v83
  %v345 = vunpack.c.l.b16 %v84
  %v346 = vunpack.c.l.b16 %v85
  %v347 = vunpack.c.l.b16 %v86
  %v348 = vunpack.c.l.b16 %v87
  %v349 = vunpack.c.l.b16 %v88
  %v350 = vunpack.c.l.b16 %v89
  %v351 = vunpack.c.l.b16 %v90
  %v352 = vunpack.c.l.b16 %v91
  %v353 = vunpack.c.l.b16 %v92
  %v354 = vunpack.c.l.b16 %v93
  %v355 = vunpack.c.l.b16 %v94
  %v356 = vunpack.c.l.b16 %v95
  %v357 = vunpack.c.l.b16 %v96
  %v358 = vunpack.c.l.b16 %v97
  %v359 = vunpack.c.l.b16 %v98
  %v360 = vunpack.c.l.b16 %v99
  %v361 = vunpack.c.l.b16 %v100
  %v362 = vunpack.c.l.b16 %v101
  %v363 = vunpack.c.l.b16 %v102
  %v364 = vunpack.c.l.b16 %v103
  %v365 = vunpack.c.l.b16 %v104
  %v366 = vunpack.c.l.b16 %v105
  %v367 = vunpack.c.l.b16 %v106
  %v368 = vunpack.c.l.b16 %v107
  %v369 = vunpack.c.l.b16 %v108
  %v370 = vunpack.c.l.b16 %v109
  %v371 = vunpack.c.l.b16 %v110
  %v372 = vunpack.c.l.b16 %v111
  %v373 = vunpack.c.l.b16 %v112
  %v374 = vunpack.c.l.b16 %v113
  %v375 = vunpack.c.l.b16 %v114
  %v376 = vunpack.c.l.b16 %v115
  %v377 = vunpack.c.l.b16 %v116
  %v378 = vunpack.c.l.b16 %v117
  %v379 = vunpack.c.l.b16 %v118
  %v380 = vunpack.c.l.b16 %v119
  %v381 = vunpack.c.l.b16 %v120
  %v382 = vunpack.c.l.b16 %v121
  %v383 = vunpack.c.l.b16 %v122
  %v384 = vunpack.c.l.b16 %v123
  %v385 = vunpack.c.l.b16 %v124
  %v386 = vunpack.c.l.b16 %v125
  %v387 = vunpack.c.l.b16 %v126
  %v388 = vunpack.c.l.b16 %v127
  %v389 = vunpack.c.l.b16 %v128
  %v390 = vunpack.c.l.b16 %v129
  %v391 = vunpack.c.l.b16 %v130
  %v392 = vunpack.c.l.b16 %v131
  %v393 = vunpack.c.l.b16 %v132
  %v394 = vunpack.c.l.b16 %v133
  %v395 = vunpack.c.l.b16 %v134
  %v396 = vunpack.c.l.b16 %v135
  %v397 = vunpack.c.l.b16 %v136
  %v398 = vunpack.c.l.b16 %v137
  %v399 = vunpack.c.l.b16 %v138
  %v400 = vunpack.c.l.b16 %v139
  %v401 = vunpack.c.l.b16 %v140
  %v402 = vunpack.c.l.b16 %v141
  %v403 = vunpack.c.l.b16 %v142
  %v404 = vunpack.c.l.b16 %v143
  %v405 = vunpack.c.l.b16 %v144
  %v406 = vunpack.c.l.b16 %v145
  %v407 = vunpack.c.l.b16 %v146
  %v408 = vunpack.c.l.b16 %v147
  %v409 = vunpack.c.l.b16 %v148
  %v410 = vunpack.c.l.b16 %v149
  %v411 = vunpack.c.l.b16 %v150
  %v412 = vunpack.c.l.b16 %v151
  %v413 = vunpack.c.l.b16 %v152
  %v414 = vunpack.c.l.b16 %v153
  %v415 = vunpack.c.l.b16 %v154
  %v416 = vunpack.c.l.b16 %v155
  %v417 = vunpack.c.l.b16 %v156
  %v418 = vunpack.c.l.b16 %v157
  %v419 = vunpack.c.l.b16 %v158
  %v420 = vunpack.c.l.b16 %v159
  %v421 = vunpack.c.l.b16 %v160
  %v422 = vunpack.c.l.b16 %v161
  %v423 = vunpack.c.l.b16 %v162
  %v424 = vunpack.c.l.b16 %v163
  %v425 = vunpack.c.l.b16 %v164
  %v426 = vunpack.c.l.b16 %v165
  %v427 = vunpack.c.l.b16 %v166
  %v428 = vunpack.c.l.b16 %v167
  %v429 = vunpack.c.l.b16 %v168
  %v430 = vunpack.c.l.b16 %v169
  %v431 = vunpack.c.l.b16 %v170
  %v432 = vunpack.c.l.b16 %v171
  %v433 = vunpack.c.l.b16 %v172
  %v434 = vpack.c.b16 %v307, %v306
  %v435 = vpack.c.b16 %v309, %v308
  %v436 = vpack.c.b16 %v311, %v310
  %v437 = vpack.c.b16 %v313, %v312
  %v438 = vpack.c.b16 %v315, %v314
  %v439 = vpack.c.b16 %v317, %v316
  %v440 = vpack.c.b16 %v319, %v318
  %v441 = vpack.c.b16 %v321, %v320
  %v442 = vpack.c.b16 %v323, %v322
  %v443 = vpack.c.b16 %v325, %v324
  %v444 = vpack.c.b16 %v327, %v326
  %v445 = vpack.c.b16 %v329, %v328
  %v446 = vpack.c.b16 %v331, %v330
  %v447 = vpack.c.b16 %v333, %v332
  %v448 = vpack.c.b16 %v335, %v334
  %v449 = vpack.c.b16 %v337, %v336
  %v450 = vpack.c.b16 %v339, %v338
  %v451 = vpack.c.b16 %v341, %v340
  %v452 = vpack.c.b16 %v343, %v342
  %v453 = vpack.c.b16 %v345, %v344
  %v454 = vpack.c.b16 %v347, %v346
  %v455 = vpack.c.b16 %v349, %v348
  %v456 = vpack.c.b16 %v351, %v350
  %v457 = vpack.c.b16 %v353, %v352
  %v458 = vpack.c.b16 %v355, %v354
  %v459 = vpack.c.b16 %v357, %v356
  %v460 = vpack.c.b16 %v359, %v358
  %v461 = vpack.c.b16 %v361, %v360
  %v462 = vpack.c.b16 %v363, %v362
  %v463 = vpack.c.b16 %v365, %v364
  %v464 = vpack.c.b16 %v367, %v366
  %v465 = vpack.c.b16 %v369, %v368
  %v466 = vpack.c.b16 %v371, %v370
  %v467 = vpack.c.b16 %v373, %v372
  %v468 = vpack.c.b16 %v375, %v374
  %v469 = vpack.c.b16 %v377, %v376
  %v470 = vpack.c.b16 %v379, %v378
  %v471 = vpack.c.b16 %v381, %v380
  %v472 = vpack.c.b16 %v383, %v382
  %v473 = vpack.c.b16 %v385, %v384
  %v474 = vpack.c.b16 %v387, %v386
  %v475 = vpack.c.b16 %v389, %v388
  %v476 = vpack.c.b16 %v391, %v390
  %v477 = vpack.c.b16 %v393, %v392
  %v478 = vpack.c.b16 %v395, %v394
  %v479 = vpack.c.b16 %v397, %v396
  %v480 = vpack.c.b16 %v399, %v398
  %v481 = vpack.c.b16 %v401, %v400
  %v482 = vpack.c.b16 %v403, %v402
  %v483 = vpack.c.b16 %v405, %v404
  %v484 = vpack.c.b16 %v407, %v406
  %v485 = vpack.c.b16 %v409, %v408
  %v486 = vpack.c.b16 %v411, %v410
  %v487 = vpack.c.b16 %v413, %v412
  %v488 = vpack.c.b16 %v415, %v414
  %v489 = vpack.c.b16 %v417, %v416
  %v490 = vpack.c.b16 %v419, %v418
  %v491 = vpack.c.b16 %v421, %v420
  %v492 = vpack.c.b16 %v423, %v422
  %v493 = vpack.c.b16 %v425, %v424
  %v494 = vpack.c.b16 %v427, %v426
  %v495 = vpack.c.b16 %v429, %v428
  %v496 = vpack.c.b16 %v431, %v430
  %v497 = vpack.c.b16 %v433, %v432
  %562 = vmatprep.subr.bf16.mxu0 0
  %563 = vmatpush1.bf16.msra.mxu0 %v441
  %564 = vmatprep.subr.bf16.mxu0 0
  %565 = vmatpush1.bf16.msra.mxu0 %v440
  %566 = vmatprep.subr.bf16.mxu0 0
  %567 = vmatpush1.bf16.msra.mxu0 %v439
  %568 = vmatprep.subr.bf16.mxu0 0
  %569 = vmatpush1.bf16.msra.mxu0 %v438
  %570 = vmatprep.subr.bf16.mxu0 0
  %571 = vmatpush1.bf16.msra.mxu0 %v437
  %572 = vmatprep.subr.bf16.mxu0 0
  %573 = vmatpush1.bf16.msra.mxu0 %v436
  %574 = vmatprep.subr.bf16.mxu0 0
  %575 = vmatpush1.bf16.msra.mxu0 %v435
  %576 = vmatprep.subr.bf16.mxu0 0
  %577 = vmatpush1.bf16.msra.mxu0 %v434
  %578 = vmatprep.subr.bf16.mxu0 0
  %579 = vmatpush2.bf16.msra.mxu0 %v449
  %580 = vmatprep.subr.bf16.mxu0 0
  %581 = vmatpush2.bf16.msra.mxu0 %v448
  %582 = vmatprep.subr.bf16.mxu0 0
  %583 = vmatpush2.bf16.msra.mxu0 %v447
  %584 = vmatprep.subr.bf16.mxu0 0
  %585 = vmatpush2.bf16.msra.mxu0 %v446
  %586 = vmatprep.subr.bf16.mxu0 0
  %587 = vmatpush2.bf16.msra.mxu0 %v445
  %588 = vmatprep.subr.bf16.mxu0 0
  %589 = vmatpush2.bf16.msra.mxu0 %v444
  %590 = vmatprep.subr.bf16.mxu0 0
  %591 = vmatpush2.bf16.msra.mxu0 %v443
  %592 = vmatprep.subr.bf16.mxu0 0
  %593 = vmatpush2.bf16.msra.mxu0 %v442
  %594 = vmatprep.mubr.bf16.mxu0 %v38
  %595 = vmatmul.mubr.bf16.gmra.mxu0 %v37
  %v596 = vpop.f32.mrf.mxu0
  %v597 = vadd.f32 %v177, %v596
  %v598 = vpop.f32.mrf.mxu0
  %v599 = vpop.f32.mrf.mxu0
  %v600 = vpop.f32.mrf.mxu0
  %601 = vdwg.mxu0
  %602 = vmatprep.subr.bf16.mxu0 0
  %603 = vmatpush1.bf16.msra.mxu0 %v457
  %604 = vmatprep.subr.bf16.mxu0 0
  %605 = vmatpush1.bf16.msra.mxu0 %v456
  %606 = vmatprep.subr.bf16.mxu0 0
  %607 = vmatpush1.bf16.msra.mxu0 %v455
  %608 = vmatprep.subr.bf16.mxu0 0
  %609 = vmatpush1.bf16.msra.mxu0 %v454
  %610 = vmatprep.subr.bf16.mxu0 0
  %611 = vmatpush1.bf16.msra.mxu0 %v453
  %612 = vmatprep.subr.bf16.mxu0 0
  %613 = vmatpush1.bf16.msra.mxu0 %v452
  %614 = vmatprep.subr.bf16.mxu0 0
  %615 = vmatpush1.bf16.msra.mxu0 %v451
  %616 = vmatprep.subr.bf16.mxu0 0
  %617 = vmatpush1.bf16.msra.mxu0 %v450
  %618 = vmatprep.subr.bf16.mxu0 0
  %619 = vmatpush2.bf16.msra.mxu0 %v465
  %620 = vmatprep.subr.bf16.mxu0 0
  %621 = vmatpush2.bf16.msra.mxu0 %v464
  %622 = vmatprep.subr.bf16.mxu0 0
  %623 = vmatpush2.bf16.msra.mxu0 %v463
  %624 = vmatprep.subr.bf16.mxu0 0
  %625 = vmatpush2.bf16.msra.mxu0 %v462
  %626 = vmatprep.subr.bf16.mxu0 0
  %627 = vmatpush2.bf16.msra.mxu0 %v461
  %628 = vmatprep.subr.bf16.mxu0 0
  %629 = vmatpush2.bf16.msra.mxu0 %v460
  %630 = vmatprep.subr.bf16.mxu0 0
  %631 = vmatpush2.bf16.msra.mxu0 %v459
  %632 = vmatprep.subr.bf16.mxu0 0
  %633 = vmatpush2.bf16.msra.mxu0 %v458
  %634 = vmatprep.mubr.bf16.mxu0 %v40
  %635 = vmatmul.mubr.bf16.gmra.mxu0 %v39
  %v636 = vpop.f32.mrf.mxu0
  %v637 = vadd.f32 %v597, %v636
  %v638 = vpop.f32.mrf.mxu0
  %v639 = vpop.f32.mrf.mxu0
  %v640 = vpop.f32.mrf.mxu0
  %641 = vdwg.mxu0
  %642 = vmatprep.subr.bf16.mxu0 0
  %643 = vmatpush1.bf16.msra.mxu0 %v473
  %644 = vmatprep.subr.bf16.mxu0 0
  %645 = vmatpush1.bf16.msra.mxu0 %v472
  %646 = vmatprep.subr.bf16.mxu0 0
  %647 = vmatpush1.bf16.msra.mxu0 %v471
  %648 = vmatprep.subr.bf16.mxu0 0
  %649 = vmatpush1.bf16.msra.mxu0 %v470
  %650 = vmatprep.subr.bf16.mxu0 0
  %651 = vmatpush1.bf16.msra.mxu0 %v469
  %652 = vmatprep.subr.bf16.mxu0 0
  %653 = vmatpush1.bf16.msra.mxu0 %v468
  %654 = vmatprep.subr.bf16.mxu0 0
  %655 = vmatpush1.bf16.msra.mxu0 %v467
  %656 = vmatprep.subr.bf16.mxu0 0
  %657 = vmatpush1.bf16.msra.mxu0 %v466
  %658 = vmatprep.subr.bf16.mxu0 0
  %659 = vmatpush2.bf16.msra.mxu0 %v481
  %660 = vmatprep.subr.bf16.mxu0 0
  %661 = vmatpush2.bf16.msra.mxu0 %v480
  %662 = vmatprep.subr.bf16.mxu0 0
  %663 = vmatpush2.bf16.msra.mxu0 %v479
  %664 = vmatprep.subr.bf16.mxu0 0
  %665 = vmatpush2.bf16.msra.mxu0 %v478
  %666 = vmatprep.subr.bf16.mxu0 0
  %667 = vmatpush2.bf16.msra.mxu0 %v477
  %668 = vmatprep.subr.bf16.mxu0 0
  %669 = vmatpush2.bf16.msra.mxu0 %v476
  %670 = vmatprep.subr.bf16.mxu0 0
  %671 = vmatpush2.bf16.msra.mxu0 %v475
  %672 = vmatprep.subr.bf16.mxu0 0
  %673 = vmatpush2.bf16.msra.mxu0 %v474
  %674 = vmatprep.mubr.bf16.mxu0 %v42
  %675 = vmatmul.mubr.bf16.gmra.mxu0 %v41
  %v676 = vpop.f32.mrf.mxu0
  %v677 = vadd.f32 %v637, %v676
  %v678 = vpop.f32.mrf.mxu0
  %v679 = vpop.f32.mrf.mxu0
  %v680 = vpop.f32.mrf.mxu0
  %681 = vdwg.mxu0
  %682 = vmatprep.subr.bf16.mxu0 0
  %683 = vmatpush1.bf16.msra.mxu0 %v489
  %684 = vmatprep.subr.bf16.mxu0 0
  %685 = vmatpush1.bf16.msra.mxu0 %v488
  %686 = vmatprep.subr.bf16.mxu0 0
  %687 = vmatpush1.bf16.msra.mxu0 %v487
  %688 = vmatprep.subr.bf16.mxu0 0
  %689 = vmatpush1.bf16.msra.mxu0 %v486
  %690 = vmatprep.subr.bf16.mxu0 0
  %691 = vmatpush1.bf16.msra.mxu0 %v485
  %692 = vmatprep.subr.bf16.mxu0 0
  %693 = vmatpush1.bf16.msra.mxu0 %v484
  %694 = vmatprep.subr.bf16.mxu0 0
  %695 = vmatpush1.bf16.msra.mxu0 %v483
  %696 = vmatprep.subr.bf16.mxu0 0
  %697 = vmatpush1.bf16.msra.mxu0 %v482
  %698 = vmatprep.subr.bf16.mxu0 0
  %699 = vmatpush2.bf16.msra.mxu0 %v497
  %700 = vmatprep.subr.bf16.mxu0 0
  %701 = vmatpush2.bf16.msra.mxu0 %v496
  %702 = vmatprep.subr.bf16.mxu0 0
  %703 = vmatpush2.bf16.msra.mxu0 %v495
  %704 = vmatprep.subr.bf16.mxu0 0
  %705 = vmatpush2.bf16.msra.mxu0 %v494
  %706 = vmatprep.subr.bf16.mxu0 0
  %707 = vmatpush2.bf16.msra.mxu0 %v493
  %708 = vmatprep.subr.bf16.mxu0 0
  %709 = vmatpush2.bf16.msra.mxu0 %v492
  %710 = vmatprep.subr.bf16.mxu0 0
  %711 = vmatpush2.bf16.msra.mxu0 %v491
  %712 = vmatprep.subr.bf16.mxu0 0
  %713 = vmatpush2.bf16.msra.mxu0 %v490
  %714 = vmatprep.mubr.bf16.mxu0 %v44
  %715 = vmatmul.mubr.bf16.gmra.mxu0 %v43
  %v716 = vpop.f32.mrf.mxu0
  %v717 = vadd.f32 %v677, %v716
  %v718 = vpop.f32.mrf.mxu0
  %v719 = vpop.f32.mrf.mxu0
  %v720 = vpop.f32.mrf.mxu0
  %721 = vdwg.mxu0
  %v722 = vmax.f32 %v717, 0.0
  %v723 = vpack.c.bf16 %v722, %v722
  %v724 = vld [vmem:[%s3] sm:$0xf]
  %v725 = vld [vmem:[%s3 + $0x4] sm:$0xf]
  %v726 = vld [vmem:[%s3 + $0x8] sm:$0xf]
  %v727 = vld [vmem:[%s3 + $0xc] sm:$0xf]
  %v728 = vld [vmem:[%s3 + $0x10] sm:$0xf]
  %v729 = vld [vmem:[%s3 + $0x14] sm:$0xf]
  %v730 = vld [vmem:[%s3 + $0x18] sm:$0xf]
  %v731 = vld [vmem:[%s3 + $0x1c] sm:$0xf]
  %v732 = vlaneseq
  %v733 = vshrl.u32 %v732, 7
  %v734 = vsub.s32 1, %v733
  %v735 = vrot.slane %v173, %v734
  %v744 = vunpack.c.l.b16 %v724
  %v745 = vunpack.c.l.b16 %v725
  %v746 = vunpack.c.l.b16 %v726
  %v747 = vunpack.c.l.b16 %v727
  %v748 = vunpack.c.l.b16 %v728
  %v749 = vunpack.c.l.b16 %v729
  %v750 = vunpack.c.l.b16 %v730
  %v751 = vunpack.c.l.b16 %v731
  %v752 = vpack.c.b16 %v745, %v744
  %v753 = vpack.c.b16 %v747, %v746
  %v754 = vpack.c.b16 %v749, %v748
  %v755 = vpack.c.b16 %v751, %v750
  %vm760 = vcmask 523264
  %v762 = vsel %vm760, %v723, 0
  %764 = vmatprep.subr.bf16.mxu0 0
  %765 = vmatpush1.bf16.msra.mxu0 0
  %766 = vmatprep.subr.bf16.mxu0 0
  %767 = vmatpush1.bf16.msra.mxu0 0
  %768 = vmatprep.subr.bf16.mxu0 0
  %769 = vmatpush1.bf16.msra.mxu0 0
  %770 = vmatprep.subr.bf16.mxu0 0
  %771 = vmatpush1.bf16.msra.mxu0 0
  %772 = vmatprep.subr.bf16.mxu0 0
  %773 = vmatpush1.bf16.msra.mxu0 %v755
  %774 = vmatprep.subr.bf16.mxu0 0
  %775 = vmatpush1.bf16.msra.mxu0 %v754
  %776 = vmatprep.subr.bf16.mxu0 0
  %777 = vmatpush1.bf16.msra.mxu0 %v753
  %778 = vmatprep.subr.bf16.mxu0 0
  %779 = vmatpush1.bf16.msra.mxu0 %v752
  %780 = vmatprep.subr.bf16.mxu0 0
  %781 = vmatpush2.bf16.msra.mxu0 0
  %782 = vmatprep.subr.bf16.mxu0 0
  %783 = vmatpush2.bf16.msra.mxu0 0
  %784 = vmatprep.subr.bf16.mxu0 0
  %785 = vmatpush2.bf16.msra.mxu0 0
  %786 = vmatprep.subr.bf16.mxu0 0
  %787 = vmatpush2.bf16.msra.mxu0 0
  %788 = vmatprep.subr.bf16.mxu0 0
  %789 = vmatpush2.bf16.msra.mxu0 0
  %790 = vmatprep.subr.bf16.mxu0 0
  %791 = vmatpush2.bf16.msra.mxu0 0
  %792 = vmatprep.subr.bf16.mxu0 0
  %793 = vmatpush2.bf16.msra.mxu0 0
  %794 = vmatprep.subr.bf16.mxu0 0
  %795 = vmatpush2.bf16.msra.mxu0 0
  %796 = vmatprep.mubr.bf16.mxu0 0
  %797 = vmatmul.mubr.bf16.gmra.mxu0 %v762
  %v798 = vpop.f32.mrf.mxu0
  %v799 = vadd.f32 %v735, %v798
  %v800 = vpop.f32.mrf.mxu0
  %v801 = vpop.f32.mrf.mxu0
  %v802 = vpop.f32.mrf.mxu0
  %803 = vdwg.mxu0
  %v804 = vmax.f32 %v799, 0.0
  %v805 = vld [vmem:[%s4] sm:$0xf]
  %v806 = vpack.c.bf16 %v804, %v804
  %v808 = vsel %vm760, %v805, 0
  %v811 = vsel %vm760, %v806, 0
  %813 = vmatprep.subr.bf16.mxu0 0
  %814 = vmatpush1.bf16.xpose.msra.mxu0 0
  %815 = vmatprep.subr.bf16.mxu0 0
  %816 = vmatpush1.bf16.xpose.msra.mxu0 0
  %817 = vmatprep.subr.bf16.mxu0 0
  %818 = vmatpush1.bf16.xpose.msra.mxu0 0
  %819 = vmatprep.subr.bf16.mxu0 0
  %820 = vmatpush1.bf16.xpose.msra.mxu0 0
  %821 = vmatprep.subr.bf16.mxu0 0
  %822 = vmatpush1.bf16.xpose.msra.mxu0 0
  %823 = vmatprep.subr.bf16.mxu0 0
  %824 = vmatpush1.bf16.xpose.msra.mxu0 0
  %825 = vmatprep.subr.bf16.mxu0 0
  %826 = vmatpush1.bf16.xpose.msra.mxu0 0
  %827 = vmatprep.subr.bf16.mxu0 0
  %828 = vmatpush1.bf16.xpose.msra.mxu0 %v811
  %829 = vmatprep.subr.bf16.mxu0 0
  %830 = vmatpush2.bf16.xpose.msra.mxu0 0
  %831 = vmatprep.subr.bf16.mxu0 0
  %832 = vmatpush2.bf16.xpose.msra.mxu0 0
  %833 = vmatprep.subr.bf16.mxu0 0
  %834 = vmatpush2.bf16.xpose.msra.mxu0 0
  %835 = vmatprep.subr.bf16.mxu0 0
  %836 = vmatpush2.bf16.xpose.msra.mxu0 0
  %837 = vmatprep.subr.bf16.mxu0 0
  %838 = vmatpush2.bf16.xpose.msra.mxu0 0
  %839 = vmatprep.subr.bf16.mxu0 0
  %840 = vmatpush2.bf16.xpose.msra.mxu0 0
  %841 = vmatprep.subr.bf16.mxu0 0
  %842 = vmatpush2.bf16.xpose.msra.mxu0 0
  %843 = vmatprep.subr.bf16.mxu0 0
  %844 = vmatpush2.bf16.xpose.msra.mxu0 0
  %845 = vmatprep.mubr.bf16.mxu0 0
  %846 = vmatmul.mubr.bf16.gmra.mxu0 %v808
  %v847 = vpop.f32.mrf.mxu0
  %v848 = vadd.f32 0.0, %v847
  %v849 = vpop.f32.mrf.mxu0
  %v850 = vpop.f32.mrf.mxu0
  %v851 = vpop.f32.mrf.mxu0
  %852 = vdwg.mxu0
  %vm853 = vcmask 31744
  %854 = vst.msk [vmem:[%s5] sm:$0xff] %vm853, %v848
  // Predicated region
  $region22: #{value_net_forward.1} parent=0 // pred_check
    _
  $region23: #{value_net_forward.1} parent=0 // pred_check_branch
    %856 = sbr.rel (0) target = $region25
  $region24: #{value_net_forward.1} parent=0 // pred_region
    _
  $region25: #{value_net_forward.1} parent=0 // pred_fallthru
    _
  // Predicated region
  $region26: #{value_net_forward.1} parent=0 // pred_check
    _
  $region27: #{value_net_forward.1} parent=0 // pred_check_branch
    %858 = sbr.rel (0) target = $region29
  $region28: #{value_net_forward.1} parent=0 // pred_region
    _
  $region29: #{value_net_forward.1} parent=0 // pred_fallthru
    _

</llo_original>
